<compile_context>
chip_gen: v7x
topology: tpu7x:2x2x1
jax: 0.10.0
libtpu: 0.0.40
codegen_flags: <defaults>
</compile_context>

<pallas_src>
import jax
import jax.numpy as jnp
import numpy as np
from jax import lax
from jax.experimental import pallas as pl
from jax.experimental.pallas import tpu as pltpu


def _sdca_kernel(x_ref, wband_ref, bwide_ref, pool_ref, w1_ref, b1_ref,
                 alpha_ref, w2_ref, b2_ref, gatebc_ref, o_ref):
    """One batch element per grid step, lane-dense layout.

    x_ref     : (1, H, W*C)      lane-dense NHWC input (unpadded)
    wband_ref : (k, W*C, W*C)    banded weights (depthwise taps folded through the
                                 1x1 conv, W-direction reflect pad folded in)
    bwide_ref : (1, W*C)         effective bias, tiled per W position
    pool_ref  : (W*C, C)         average-pool matrix (includes 1/(H*W) scale)
    w1_ref    : (C, Cr), b1_ref/alpha_ref: (1, Cr)   CAM squeeze + PReLU
    w2_ref    : (Cr, C), b2_ref: (1, C)              CAM excite
    gatebc_ref: (C, W*C)         per-channel gate broadcast matrix
    o_ref     : (1, H, W*C)
    """
    k = wband_ref.shape[0]
    p = (k - 1) // 2
    H = x_ref.shape[1]

    x = x_ref[0]                                            # (H, W*C), f32

    # Reflect padding along H only (W/channel reflect is pre-folded into wband).
    if p > 0:
        top = [x[i:i + 1, :] for i in range(p, 0, -1)]
        bot = [x[H - 1 - i:H - i, :] for i in range(1, p + 1)]
        xh = jnp.concatenate(top + [x] + bot, axis=0)       # (H + 2p, W*C)
    else:
        xh = x

    # Fused (4-way mixed depthwise + 1x1) conv: k accumulating MXU matmuls.
    q = jnp.dot(xh[0:H, :], wband_ref[0], preferred_element_type=jnp.float32)
    for dy in range(1, k):
        q = q + jnp.dot(xh[dy:dy + H, :], wband_ref[dy],
                        preferred_element_type=jnp.float32)
    q = q + bwide_ref[...]                                  # (H, W*C)

    # CAM channel attention: global average pool -> 1x1 -> PReLU -> 1x1 -> sigmoid.
    colsum = jnp.sum(q, axis=0, keepdims=True)                                # (1, W*C)
    m = jnp.dot(colsum, pool_ref[...], preferred_element_type=jnp.float32)    # (1, C)
    z1 = jnp.dot(m, w1_ref[...], preferred_element_type=jnp.float32) + b1_ref[...]
    z1 = jnp.where(z1 >= 0.0, z1, alpha_ref[...] * z1)                        # PReLU
    z2 = jnp.dot(z1, w2_ref[...], preferred_element_type=jnp.float32) + b2_ref[...]
    s_wide = jnp.dot(jax.nn.sigmoid(z2), gatebc_ref[...],
                     preferred_element_type=jnp.float32)                      # (1, W*C)

    # forward(x) = sigmoid((q * gate) * q)
    o_ref[0] = jax.nn.sigmoid(q * q * s_wide).astype(o_ref.dtype)


def simplified_depthwise_ca(x_nchw, kernel_params):
    """Fused SimplifiedDepthwiseCA forward. x_nchw: (N, C, H, W) f32."""
    wband, bwide, pool, w1, b1, alpha, w2, b2, gatebc = kernel_params
    N, C, H, W = x_nchw.shape
    k = wband.shape[0]
    WC = W * C
    Cr = w1.shape[1]

    # NCHW -> NHWC (one transpose pass), then a free bitcast-reshape to the
    # lane-dense (N, H, W*C) view the kernel consumes.  Reflect padding happens
    # inside the kernel / inside the weights, so no padded HBM copy is made.
    x_ld = jnp.transpose(x_nchw, (0, 2, 3, 1)).reshape(N, H, WC)

    out_ld = pl.pallas_call(
        _sdca_kernel,
        out_shape=jax.ShapeDtypeStruct((N, H, WC), x_nchw.dtype),
        grid_spec=pltpu.PrefetchScalarGridSpec(
            num_scalar_prefetch=0,
            grid=(N,),
            in_specs=[
                pl.BlockSpec((1, H, WC), lambda n: (n, 0, 0)),   # x (lane-dense)
                pl.BlockSpec((k, WC, WC), lambda n: (0, 0, 0)),  # wband
                pl.BlockSpec((1, WC), lambda n: (0, 0)),         # bwide
                pl.BlockSpec((WC, C), lambda n: (0, 0)),         # pool
                pl.BlockSpec((C, Cr), lambda n: (0, 0)),         # w1
                pl.BlockSpec((1, Cr), lambda n: (0, 0)),         # b1
                pl.BlockSpec((1, Cr), lambda n: (0, 0)),         # alpha
                pl.BlockSpec((Cr, C), lambda n: (0, 0)),         # w2
                pl.BlockSpec((1, C), lambda n: (0, 0)),          # b2
                pl.BlockSpec((C, WC), lambda n: (0, 0)),         # gate broadcast
            ],
            out_specs=pl.BlockSpec((1, H, WC), lambda n: (n, 0, 0)),
        ),
        compiler_params=pltpu.CompilerParams(dimension_semantics=("parallel",)),
    )(x_ld, wband, bwide, pool, w1, b1, alpha, w2, b2, gatebc)

    return jnp.transpose(out_ld.reshape(N, H, W, C), (0, 3, 1, 2))   # back to NCHW


# ---------------- parameter setup (deterministic, PyTorch-layout) ----------------
def init_params(key, C, k, K, num_cnvs=4, compress=8):
    Cr = max(C // compress, 1)
    ks = jax.random.split(key, 8)
    pt = dict(
        dw_w=jax.random.normal(ks[0], (num_cnvs, C * K, 1, k, k), jnp.float32) / (k * k),
        dw_b=jax.random.normal(ks[1], (num_cnvs, C * K), jnp.float32) * 0.1,
        mix=jnp.full((num_cnvs,), 1.0 / num_cnvs, jnp.float32),      # module init value
        pw_w=jax.random.normal(ks[2], (C, C * K, 1, 1), jnp.float32) / (C * K) ** 0.5,
        pw_b=jax.random.normal(ks[3], (C,), jnp.float32) * 0.1,
        w1=jax.random.normal(ks[4], (Cr, C, 1, 1), jnp.float32) / C ** 0.5,
        b1=jax.random.normal(ks[5], (Cr,), jnp.float32) * 0.1,
        w2=jax.random.normal(ks[6], (C, Cr, 1, 1), jnp.float32) / Cr ** 0.5,
        b2=jax.random.normal(ks[7], (C,), jnp.float32) * 0.1,
        alpha=jnp.float32(0.25),                                     # PReLU init
    )
    return pt


def to_kernel_params(pt, C, k, K, H, W):
    """Fold PyTorch-layout params into the lane-dense kernel parameters (exact)."""
    Cr = pt["w1"].shape[0]
    mix = pt["mix"]
    p = (k - 1) // 2

    # (1) Fold the num_cnvs mixed depthwise convs into one (linearity).
    wdw = jnp.einsum("i,iokl->okl", mix, pt["dw_w"][:, :, 0])        # (C*K, k, k)
    bdw = jnp.einsum("i,io->o", mix, pt["dw_b"])                     # (C*K,)
    pw2d = pt["pw_w"][:, :, 0, 0]                                    # (C_out, C*K)

    # (2) Fold the depthwise taps through the 1x1 conv: Weff[dy,dx] is (C_in, C_out).
    wdw4 = wdw.reshape(C, K, k, k)                                   # [c_in, j, dy, dx]
    pw3 = pw2d.reshape(C, C, K)                                      # [c_out, c_in, j]
    weff = jnp.einsum("cjyx,dcj->yxcd", wdw4, pw3)                   # (k, k, C_in, C_out)
    beff = pw2d @ bdw + pt["pw_b"]                                   # (C,)  bias folded thru 1x1

    # (3) Fold the W-direction taps AND the W reflect padding into banded
    #     lane-dense matrices: q_row[h] = sum_dy x_hpad_row[h+dy] @ wband[dy].
    def refl(i, n):
        if i < 0:
            return -i
        if i >= n:
            return 2 * (n - 1) - i
        return i

    T = np.zeros((k, W, W), np.float32)       # T[dx][src_w, out_w]
    for dx in range(k):
        for wo in range(W):
            T[dx, refl(wo + dx - p, W), wo] = 1.0
    wband = jnp.stack([
        sum(jnp.kron(jnp.asarray(T[dx]), weff[dy, dx]) for dx in range(k))
        for dy in range(k)])                                         # (k, W*C, W*C)

    bwide = jnp.tile(beff.reshape(1, C), (1, W))                     # (1, W*C)

    # Average-pool matrix (sum over W lane-groups, 1/(H*W) folded in) and the
    # per-channel gate broadcast matrix.
    pool_np = np.kron(np.ones((W, 1), np.float32), np.eye(C, dtype=np.float32))
    pool = jnp.asarray(pool_np / float(H * W))                       # (W*C, C)
    gatebc = jnp.asarray(pool_np.T)                                  # (C, W*C)

    w1 = pt["w1"][:, :, 0, 0].T                                      # (C, Cr)
    b1 = pt["b1"].reshape(1, Cr)
    alpha = jnp.full((1, Cr), pt["alpha"], jnp.float32)
    w2 = pt["w2"][:, :, 0, 0].T                                      # (Cr, C)
    b2 = pt["b2"].reshape(1, C)
    return (wband, bwide, pool, w1, b1, alpha, w2, b2, gatebc)


# ---------------- pure-JAX reference (mirrors the PyTorch ops directly) ----------------
def reference(x_nchw, pt, C, k, K):
    p = (k - 1) // 2
    xp = jnp.pad(x_nchw, ((0, 0), (0, 0), (p, p), (p, p)), mode="reflect")
    feats = 0.0
    for i in range(pt["dw_w"].shape[0]):
        ci = lax.conv_general_dilated(
            xp, pt["dw_w"][i], (1, 1), "VALID",
            dimension_numbers=("NCHW", "OIHW", "NCHW"),
            feature_group_count=C) + pt["dw_b"][i][None, :, None, None]
        feats = feats + pt["mix"][i] * ci
    q = lax.conv_general_dilated(
        feats, pt["pw_w"], (1, 1), "VALID",
        dimension_numbers=("NCHW", "OIHW", "NCHW")) + pt["pw_b"][None, :, None, None]
    y = jnp.mean(q, axis=(2, 3), keepdims=True)
    z1 = jnp.einsum("rc,ncij->nrij", pt["w1"][:, :, 0, 0], y) + pt["b1"][None, :, None, None]
    z1 = jnp.where(z1 >= 0, z1, pt["alpha"] * z1)
    z2 = jnp.einsum("or,nrij->noij", pt["w2"][:, :, 0, 0], z1) + pt["b2"][None, :, None, None]
    s = jax.nn.sigmoid(z2)
    w = q * s
    return jax.nn.sigmoid(w * q)


if __name__ == "__main__":
    # num_channels=8 -> CAM bottleneck Cr = 8 // 8 = 1;  W*C = 16*8 = 128 lanes.
    N, C, H, W = 2, 8, 16, 16
    k, K = 3, 2

    x = jax.random.normal(jax.random.PRNGKey(0), (N, C, H, W), jnp.float32)
    pt = init_params(jax.random.PRNGKey(42), C, k, K)
    kp = to_kernel_params(pt, C, k, K, H, W)

    fn = jax.jit(simplified_depthwise_ca)
    out = jax.block_until_ready(fn(x, kp))

    ref = reference(x, pt, C, k, K)
    np.testing.assert_allclose(np.asarray(out), np.asarray(ref), rtol=2e-4, atol=2e-5)
    print("KERNEL_OK")
</pallas_src>

<mosaic_0001>
module attributes {stable_mosaic.version = 11 : i64} {
  func.func @_sdca_kernel(%arg0: i32, %arg1: memref<1x16x128xf32, #tpu.memory_space<vmem>>, %arg2: memref<3x128x128xf32, #tpu.memory_space<vmem>>, %arg3: memref<1x128xf32, #tpu.memory_space<vmem>>, %arg4: memref<128x8xf32, #tpu.memory_space<vmem>>, %arg5: memref<8x1xf32, #tpu.memory_space<vmem>>, %arg6: memref<1x1xf32, #tpu.memory_space<vmem>>, %arg7: memref<1x1xf32, #tpu.memory_space<vmem>>, %arg8: memref<1x8xf32, #tpu.memory_space<vmem>>, %arg9: memref<1x8xf32, #tpu.memory_space<vmem>>, %arg10: memref<8x128xf32, #tpu.memory_space<vmem>>, %arg11: memref<1x16x128xf32, #tpu.memory_space<vmem>>) attributes {dimension_semantics = [#tpu.dimension_semantics<parallel>], iteration_bounds = array<i64: 2>, scalar_prefetch = 0 : i64, scratch_operands = 0 : i64, tpu.core_type = #tpu.core_type<tc>, window_params = [{transform_indices = @transform_0, window_bounds = array<i64: 1, 16, 128>}, {pipeline_mode = #tpu.pipeline_mode<synchronous>, transform_indices = @transform_1, window_bounds = array<i64: 3, 128, 128>}, {pipeline_mode = #tpu.pipeline_mode<synchronous>, transform_indices = @transform_2, window_bounds = array<i64: 1, 128>}, {pipeline_mode = #tpu.pipeline_mode<synchronous>, transform_indices = @transform_3, window_bounds = array<i64: 128, 8>}, {pipeline_mode = #tpu.pipeline_mode<synchronous>, transform_indices = @transform_4, window_bounds = array<i64: 8, 1>}, {pipeline_mode = #tpu.pipeline_mode<synchronous>, transform_indices = @transform_5, window_bounds = array<i64: 1, 1>}, {pipeline_mode = #tpu.pipeline_mode<synchronous>, transform_indices = @transform_6, window_bounds = array<i64: 1, 1>}, {pipeline_mode = #tpu.pipeline_mode<synchronous>, transform_indices = @transform_7, window_bounds = array<i64: 1, 8>}, {pipeline_mode = #tpu.pipeline_mode<synchronous>, transform_indices = @transform_8, window_bounds = array<i64: 1, 8>}, {pipeline_mode = #tpu.pipeline_mode<synchronous>, transform_indices = @transform_9, window_bounds = array<i64: 8, 128>}, {transform_indices = @transform_10, window_bounds = array<i64: 1, 16, 128>}]} {
    %c0 = arith.constant 0 : index
    %c0_0 = arith.constant 0 : index
    %c0_1 = arith.constant 0 : index
    %0 = vector.load %arg1[%c0, %c0_0, %c0_1] : memref<1x16x128xf32, #tpu.memory_space<vmem>>, vector<1x16x128xf32>
    %1 = vector.shape_cast %0 : vector<1x16x128xf32> to vector<16x128xf32>
    %2 = vector.extract_strided_slice %1 {offsets = [1, 0], sizes = [1, 128], strides = [1, 1]} : vector<16x128xf32> to vector<1x128xf32>
    %3 = vector.extract_strided_slice %1 {offsets = [14, 0], sizes = [1, 128], strides = [1, 1]} : vector<16x128xf32> to vector<1x128xf32>
    %4 = tpu.concatenate %2, %1, %3 in 0 : vector<1x128xf32>, vector<16x128xf32>, vector<1x128xf32> -> vector<18x128xf32>
    %5 = vector.extract_strided_slice %4 {offsets = [0, 0], sizes = [16, 128], strides = [1, 1]} : vector<18x128xf32> to vector<16x128xf32>
    %c0_2 = arith.constant 0 : index
    %c0_3 = arith.constant 0 : index
    %c0_4 = arith.constant 0 : index
    %6 = vector.load %arg2[%c0_2, %c0_3, %c0_4] : memref<3x128x128xf32, #tpu.memory_space<vmem>>, vector<1x128x128xf32>
    %7 = vector.shape_cast %6 : vector<1x128x128xf32> to vector<128x128xf32>
    %cst = arith.constant dense<0.000000e+00> : vector<16x128xf32>
    %8 = tpu.matmul %5, %7, %cst {dimension_numbers = #tpu.dot_dimension_numbers<[1], [0], [0], [1], [0, 0, 1, 1], [], []>} : vector<16x128xf32>, vector<128x128xf32>, vector<16x128xf32> -> vector<16x128xf32>
    %9 = vector.extract_strided_slice %4 {offsets = [1, 0], sizes = [16, 128], strides = [1, 1]} : vector<18x128xf32> to vector<16x128xf32>
    %c1 = arith.constant 1 : index
    %c0_5 = arith.constant 0 : index
    %c0_6 = arith.constant 0 : index
    %10 = vector.load %arg2[%c1, %c0_5, %c0_6] : memref<3x128x128xf32, #tpu.memory_space<vmem>>, vector<1x128x128xf32>
    %11 = vector.shape_cast %10 : vector<1x128x128xf32> to vector<128x128xf32>
    %cst_7 = arith.constant dense<0.000000e+00> : vector<16x128xf32>
    %12 = tpu.matmul %9, %11, %cst_7 {dimension_numbers = #tpu.dot_dimension_numbers<[1], [0], [0], [1], [0, 0, 1, 1], [], []>} : vector<16x128xf32>, vector<128x128xf32>, vector<16x128xf32> -> vector<16x128xf32>
    %13 = arith.addf %8, %12 : vector<16x128xf32>
    %14 = vector.extract_strided_slice %4 {offsets = [2, 0], sizes = [16, 128], strides = [1, 1]} : vector<18x128xf32> to vector<16x128xf32>
    %c2 = arith.constant 2 : index
    %c0_8 = arith.constant 0 : index
    %c0_9 = arith.constant 0 : index
    %15 = vector.load %arg2[%c2, %c0_8, %c0_9] : memref<3x128x128xf32, #tpu.memory_space<vmem>>, vector<1x128x128xf32>
    %16 = vector.shape_cast %15 : vector<1x128x128xf32> to vector<128x128xf32>
    %cst_10 = arith.constant dense<0.000000e+00> : vector<16x128xf32>
    %17 = tpu.matmul %14, %16, %cst_10 {dimension_numbers = #tpu.dot_dimension_numbers<[1], [0], [0], [1], [0, 0, 1, 1], [], []>} : vector<16x128xf32>, vector<128x128xf32>, vector<16x128xf32> -> vector<16x128xf32>
    %18 = arith.addf %13, %17 : vector<16x128xf32>
    %c0_11 = arith.constant 0 : index
    %c0_12 = arith.constant 0 : index
    %19 = vector.load %arg3[%c0_11, %c0_12] : memref<1x128xf32, #tpu.memory_space<vmem>>, vector<1x128xf32>
    %20 = vector.broadcast %19 : vector<1x128xf32> to vector<16x128xf32>
    %21 = arith.addf %18, %20 : vector<16x128xf32>
    %cst_13 = arith.constant dense<0.000000e+00> : vector<128xf32>
    %22 = vector.multi_reduction <add>, %21, %cst_13 [0] : vector<16x128xf32> to vector<128xf32>
    %23 = vector.shape_cast %22 : vector<128xf32> to vector<1x128xf32>
    %c0_14 = arith.constant 0 : index
    %c0_15 = arith.constant 0 : index
    %24 = vector.load %arg4[%c0_14, %c0_15] : memref<128x8xf32, #tpu.memory_space<vmem>>, vector<128x8xf32>
    %cst_16 = arith.constant dense<0.000000e+00> : vector<1x8xf32>
    %25 = tpu.matmul %23, %24, %cst_16 {dimension_numbers = #tpu.dot_dimension_numbers<[1], [0], [0], [1], [0, 0, 1, 1], [], []>} : vector<1x128xf32>, vector<128x8xf32>, vector<1x8xf32> -> vector<1x8xf32>
    %c0_17 = arith.constant 0 : index
    %c0_18 = arith.constant 0 : index
    %26 = vector.load %arg5[%c0_17, %c0_18] : memref<8x1xf32, #tpu.memory_space<vmem>>, vector<8x1xf32>
    %cst_19 = arith.constant dense<0.000000e+00> : vector<1x1xf32>
    %27 = tpu.matmul %25, %26, %cst_19 {dimension_numbers = #tpu.dot_dimension_numbers<[1], [0], [0], [1], [0, 0, 1, 1], [], []>} : vector<1x8xf32>, vector<8x1xf32>, vector<1x1xf32> -> vector<1x1xf32>
    %c0_20 = arith.constant 0 : index
    %c0_21 = arith.constant 0 : index
    %28 = vector.load %arg6[%c0_20, %c0_21] : memref<1x1xf32, #tpu.memory_space<vmem>>, vector<1x1xf32>
    %29 = arith.addf %27, %28 : vector<1x1xf32>
    %cst_22 = arith.constant 0.000000e+00 : f32
    %30 = vector.broadcast %cst_22 : f32 to vector<1x1xf32>
    %31 = arith.cmpf oge, %29, %30 : vector<1x1xf32>
    %c0_23 = arith.constant 0 : index
    %c0_24 = arith.constant 0 : index
    %32 = vector.load %arg7[%c0_23, %c0_24] : memref<1x1xf32, #tpu.memory_space<vmem>>, vector<1x1xf32>
    %33 = arith.mulf %32, %29 : vector<1x1xf32>
    %34 = arith.select %31, %29, %33 : vector<1x1xi1>, vector<1x1xf32>
    %c0_25 = arith.constant 0 : index
    %c0_26 = arith.constant 0 : index
    %35 = vector.load %arg8[%c0_25, %c0_26] : memref<1x8xf32, #tpu.memory_space<vmem>>, vector<1x8xf32>
    %cst_27 = arith.constant dense<0.000000e+00> : vector<1x8xf32>
    %36 = tpu.matmul %34, %35, %cst_27 {dimension_numbers = #tpu.dot_dimension_numbers<[1], [0], [0], [1], [0, 0, 1, 1], [], []>} : vector<1x1xf32>, vector<1x8xf32>, vector<1x8xf32> -> vector<1x8xf32>
    %c0_28 = arith.constant 0 : index
    %c0_29 = arith.constant 0 : index
    %37 = vector.load %arg9[%c0_28, %c0_29] : memref<1x8xf32, #tpu.memory_space<vmem>>, vector<1x8xf32>
    %38 = arith.addf %36, %37 : vector<1x8xf32>
    %39 = arith.negf %38 : vector<1x8xf32>
    %40 = math.exp %39 : vector<1x8xf32>
    %cst_30 = arith.constant 1.000000e+00 : f32
    %41 = vector.broadcast %cst_30 : f32 to vector<1x8xf32>
    %42 = arith.addf %41, %40 : vector<1x8xf32>
    %43 = arith.divf %41, %42 : vector<1x8xf32>
    %c0_31 = arith.constant 0 : index
    %c0_32 = arith.constant 0 : index
    %44 = vector.load %arg10[%c0_31, %c0_32] : memref<8x128xf32, #tpu.memory_space<vmem>>, vector<8x128xf32>
    %cst_33 = arith.constant dense<0.000000e+00> : vector<1x128xf32>
    %45 = tpu.matmul %43, %44, %cst_33 {dimension_numbers = #tpu.dot_dimension_numbers<[1], [0], [0], [1], [0, 0, 1, 1], [], []>} : vector<1x8xf32>, vector<8x128xf32>, vector<1x128xf32> -> vector<1x128xf32>
    %46 = arith.mulf %21, %21 : vector<16x128xf32>
    %47 = vector.broadcast %45 : vector<1x128xf32> to vector<16x128xf32>
    %48 = arith.mulf %46, %47 : vector<16x128xf32>
    %49 = arith.negf %48 : vector<16x128xf32>
    %50 = math.exp %49 : vector<16x128xf32>
    %cst_34 = arith.constant 1.000000e+00 : f32
    %51 = vector.broadcast %cst_34 : f32 to vector<16x128xf32>
    %52 = arith.addf %51, %50 : vector<16x128xf32>
    %53 = arith.divf %51, %52 : vector<16x128xf32>
    %c0_35 = arith.constant 0 : index
    %c0_36 = arith.constant 0 : index
    %c0_37 = arith.constant 0 : index
    %54 = vector.load %arg11[%c0_35, %c0_36, %c0_37] : memref<1x16x128xf32, #tpu.memory_space<vmem>>, vector<1x16x128xf32>
    %55 = vector.shape_cast %54 : vector<1x16x128xf32> to vector<16x128xf32>
    %56 = vector.shape_cast %53 : vector<16x128xf32> to vector<1x16x128xf32>
    tpu.vector_store %arg11[%c0_35, %c0_36, %c0_37], %56 {strides = array<i32>} : memref<1x16x128xf32, #tpu.memory_space<vmem>>, vector<1x16x128xf32>,
    return
  }
  func.func @transform_0(%arg0: i32) -> (i32, i32, i32) {
    %c0_i32 = arith.constant 0 : i32
    %c0_i32_0 = arith.constant 0 : i32
    %c0_i32_1 = arith.constant 0 : i32
    return %arg0, %c0_i32, %c0_i32_0 : i32, i32, i32
  }
  func.func @transform_1(%arg0: i32) -> (i32, i32, i32) {
    %c0_i32 = arith.constant 0 : i32
    %c0_i32_0 = arith.constant 0 : i32
    %c0_i32_1 = arith.constant 0 : i32
    %c0_i32_2 = arith.constant 0 : i32
    return %c0_i32, %c0_i32_0, %c0_i32_1 : i32, i32, i32
  }
  func.func @transform_2(%arg0: i32) -> (i32, i32) {
    %c0_i32 = arith.constant 0 : i32
    %c0_i32_0 = arith.constant 0 : i32
    %c0_i32_1 = arith.constant 0 : i32
    return %c0_i32, %c0_i32_0 : i32, i32
  }
  func.func @transform_3(%arg0: i32) -> (i32, i32) {
    %c0_i32 = arith.constant 0 : i32
    %c0_i32_0 = arith.constant 0 : i32
    %c0_i32_1 = arith.constant 0 : i32
    return %c0_i32, %c0_i32_0 : i32, i32
  }
  func.func @transform_4(%arg0: i32) -> (i32, i32) {
    %c0_i32 = arith.constant 0 : i32
    %c0_i32_0 = arith.constant 0 : i32
    %c0_i32_1 = arith.constant 0 : i32
    return %c0_i32, %c0_i32_0 : i32, i32
  }
  func.func @transform_5(%arg0: i32) -> (i32, i32) {
    %c0_i32 = arith.constant 0 : i32
    %c0_i32_0 = arith.constant 0 : i32
    %c0_i32_1 = arith.constant 0 : i32
    return %c0_i32, %c0_i32_0 : i32, i32
  }
  func.func @transform_6(%arg0: i32) -> (i32, i32) {
    %c0_i32 = arith.constant 0 : i32
    %c0_i32_0 = arith.constant 0 : i32
    %c0_i32_1 = arith.constant 0 : i32
    return %c0_i32, %c0_i32_0 : i32, i32
  }
  func.func @transform_7(%arg0: i32) -> (i32, i32) {
    %c0_i32 = arith.constant 0 : i32
    %c0_i32_0 = arith.constant 0 : i32
    %c0_i32_1 = arith.constant 0 : i32
    return %c0_i32, %c0_i32_0 : i32, i32
  }
  func.func @transform_8(%arg0: i32) -> (i32, i32) {
    %c0_i32 = arith.constant 0 : i32
    %c0_i32_0 = arith.constant 0 : i32
    %c0_i32_1 = arith.constant 0 : i32
    return %c0_i32, %c0_i32_0 : i32, i32
  }
  func.func @transform_9(%arg0: i32) -> (i32, i32) {
    %c0_i32 = arith.constant 0 : i32
    %c0_i32_0 = arith.constant 0 : i32
    %c0_i32_1 = arith.constant 0 : i32
    return %c0_i32, %c0_i32_0 : i32, i32
  }
  func.func @transform_10(%arg0: i32) -> (i32, i32, i32) {
    %c0_i32 = arith.constant 0 : i32
    %c0_i32_0 = arith.constant 0 : i32
    %c0_i32_1 = arith.constant 0 : i32
    return %arg0, %c0_i32, %c0_i32_0 : i32, i32, i32
  }
}

</mosaic_0001>

<llo_original>
// kernel: simplified_depthwise_ca.1
$region0: #{simplified_depthwise_ca.1}
  #allocation0 [shape = 'u32[]', space=smem, size = 0x4, offset = 0x4, fixed_abs, tag = 'smem constant byte address 0x4 - core index']
  #allocation1 [shape = 'u32[144,128]{1,0:T(1,128)}', space=vmem, size = 0x12000, scoped, tag = 'internal scratch']
  #allocation2 [shape = 'f32[1,1]{1,0:T(1,128)S(1)}', space=vmem, size = 0x200, scoped, tag = 'scoped memory for simplified_depthwise_ca.1']
  #allocation3 [shape = 'f32[1,1]{1,0:T(1,128)S(1)}', space=vmem, size = 0x200, scoped, tag = 'scoped memory for simplified_depthwise_ca.1']
  %s0 = inlined_call_operand.vmem [shape: f32[2,16,128], index: 0, kind: input, shape index: {}]
  %s1 = inlined_call_operand.vmem [shape: f32[3,128,128], index: 1, kind: input, shape index: {}]
  %s2 = inlined_call_operand.vmem [shape: f32[1,128], index: 2, kind: input, shape index: {}]
  %s3 = inlined_call_operand.vmem [shape: f32[128,8], index: 3, kind: input, shape index: {}]
  %s4 = inlined_call_operand.vmem [shape: f32[8,1], index: 4, kind: input, shape index: {}]
  %s5 = inlined_call_operand.<no memory space> [shape: f32[1,1], index: 5, kind: input, shape index: {}]
  %s6 = inlined_call_operand.<no memory space> [shape: f32[1,1], index: 6, kind: input, shape index: {}]
  %s7 = inlined_call_operand.vmem [shape: f32[1,8], index: 7, kind: input, shape index: {}]
  %s8 = inlined_call_operand.vmem [shape: f32[1,8], index: 8, kind: input, shape index: {}]
  %s9 = inlined_call_operand.vmem [shape: f32[8,128], index: 9, kind: input, shape index: {}]
  %s10 = inlined_call_operand.vmem [shape: f32[2,16,128], index: 10, kind: output, shape index: {}]
  %s11 = sld [smem:[#allocation0]]
  $region73: #{simplified_depthwise_ca.1} parent=0
    _
  %s13 = ssub.s32 1, %s11
  %s14 = scalar_select 0, %s13, %s11
  %v15 = vstv %s5
  %16 = vst [vmem:[#allocation2] sm:$0x1] %v15
  %v17 = vstv %s6
  %18 = vst [vmem:[#allocation3] sm:$0x1] %v17
  loop: start=0, step=1, limit=4
  $region2: #{simplified_depthwise_ca.1} parent=0 // loop_pre_header
    _
  $region3: #{simplified_depthwise_ca.1} parent=0 // loop_header
    %s20 = sphi 0, %s24
    %p21 = scmp.ge.s32.totalorder %s20, 4
    %s30 = sphi 0, %s32
    %s33 = sphi 0, %s30
    %s34 = sphi 0, %s33
    %s50 = sphi 0, %s34
    %s54 = sphi 0, %s54
    %s56 = sphi 0, %s54
    %s57 = sphi 0, %s56
    %s71 = sphi 0, %s57
    %s75 = sphi 0, %s75
    %s77 = sphi 0, %s75
    %s78 = sphi 0, %s77
    %s92 = sphi 0, %s78
    %s96 = sphi 0, %s96
    %s98 = sphi 0, %s96
    %s99 = sphi 0, %s98
    %s113 = sphi 0, %s99
    %s117 = sphi 0, %s117
    %s119 = sphi 0, %s117
    %s120 = sphi 0, %s119
    %s134 = sphi 0, %s120
    %s138 = sphi 0, %s138
    %s140 = sphi 0, %s138
    %s141 = sphi 0, %s140
    %s155 = sphi 0, %s141
    %s159 = sphi 0, %s159
    %s161 = sphi 0, %s159
    %s162 = sphi 0, %s161
    %s176 = sphi 0, %s162
    %s180 = sphi 0, %s180
    %s182 = sphi 0, %s180
    %s183 = sphi 0, %s182
    %s197 = sphi 0, %s183
    %s201 = sphi 0, %s201
    %s203 = sphi 0, %s201
    %s204 = sphi 0, %s203
    %s218 = sphi 0, %s204
    %s222 = sphi 0, %s222
    %s224 = sphi 0, %s222
    %s225 = sphi 0, %s224
    %s239 = sphi 0, %s225
    %s245 = sphi 0, %s247
    %s248 = sphi 0, %s245
    %s249 = sphi 0, %s248
    %s265 = sphi 0, %s249
  $region4: #{simplified_depthwise_ca.1} parent=0 // loop_header_branch
    %23 = sbr.rel (%p21) target = $region8
  $region5: #{simplified_depthwise_ca.1} parent=0 // loop_body
    %s25 = ssub.s32 %s20, 1
    %s26 = ssub.s32 %s20, 2
    %s27 = sadd.s32 %s20, 1
    %s28 = ssub.s32 %s20, %s27
    %p29 = scmp.eq.s32.totalorder %s28, 0
    %s31 = sadd.s32 %s30, 1
    %s32 = scalar_select %p29, %s30, %s31
    %p35 = pneg %p29
    %p36 = scmp.eq.s32.totalorder %s20, 1
    %p37 = por %p35, %p36
    %p38 = scmp.ne.s32.totalorder %s30, %s33
    %p39 = scmp.eq.s32.totalorder %s20, 0
    %p40 = por %p38, %p39
    %p41 = scmp.ne.s32.totalorder %s30, %s33
    %p42 = scmp.eq.s32.totalorder %s25, 1
    %p43 = por %p41, %p42
    %p44 = scmp.ne.s32.totalorder %s33, %s34
    %p45 = scmp.eq.s32.totalorder %s25, 0
    %p46 = por %p44, %p45
    %p47 = scmp.ne.s32.totalorder %s33, %s34
    %p48 = scmp.eq.s32.totalorder %s26, 1
    %p49 = por %p47, %p48
    %p51 = scmp.ne.s32.totalorder %s34, %s50
    %p52 = scmp.eq.s32.totalorder %s26, 0
    %p53 = por %p51, %p52
    %s55 = sadd.s32 %s54, 1
    %p58 = scmp.eq.s32.totalorder %s20, 1
    %p59 = scmp.ne.s32.totalorder %s54, %s56
    %p60 = scmp.eq.s32.totalorder %s20, 0
    %p61 = por %p59, %p60
    %p62 = scmp.ne.s32.totalorder %s54, %s56
    %p63 = scmp.eq.s32.totalorder %s25, 1
    %p64 = por %p62, %p63
    %p65 = scmp.ne.s32.totalorder %s56, %s57
    %p66 = scmp.eq.s32.totalorder %s25, 0
    %p67 = por %p65, %p66
    %p68 = scmp.ne.s32.totalorder %s56, %s57
    %p69 = scmp.eq.s32.totalorder %s26, 1
    %p70 = por %p68, %p69
    %p72 = scmp.ne.s32.totalorder %s57, %s71
    %p73 = scmp.eq.s32.totalorder %s26, 0
    %p74 = por %p72, %p73
    %s76 = sadd.s32 %s75, 1
    %p79 = scmp.eq.s32.totalorder %s20, 1
    %p80 = scmp.ne.s32.totalorder %s75, %s77
    %p81 = scmp.eq.s32.totalorder %s20, 0
    %p82 = por %p80, %p81
    %p83 = scmp.ne.s32.totalorder %s75, %s77
    %p84 = scmp.eq.s32.totalorder %s25, 1
    %p85 = por %p83, %p84
    %p86 = scmp.ne.s32.totalorder %s77, %s78
    %p87 = scmp.eq.s32.totalorder %s25, 0
    %p88 = por %p86, %p87
    %p89 = scmp.ne.s32.totalorder %s77, %s78
    %p90 = scmp.eq.s32.totalorder %s26, 1
    %p91 = por %p89, %p90
    %p93 = scmp.ne.s32.totalorder %s78, %s92
    %p94 = scmp.eq.s32.totalorder %s26, 0
    %p95 = por %p93, %p94
    %s97 = sadd.s32 %s96, 1
    %p100 = scmp.eq.s32.totalorder %s20, 1
    %p101 = scmp.ne.s32.totalorder %s96, %s98
    %p102 = scmp.eq.s32.totalorder %s20, 0
    %p103 = por %p101, %p102
    %p104 = scmp.ne.s32.totalorder %s96, %s98
    %p105 = scmp.eq.s32.totalorder %s25, 1
    %p106 = por %p104, %p105
    %p107 = scmp.ne.s32.totalorder %s98, %s99
    %p108 = scmp.eq.s32.totalorder %s25, 0
    %p109 = por %p107, %p108
    %p110 = scmp.ne.s32.totalorder %s98, %s99
    %p111 = scmp.eq.s32.totalorder %s26, 1
    %p112 = por %p110, %p111
    %p114 = scmp.ne.s32.totalorder %s99, %s113
    %p115 = scmp.eq.s32.totalorder %s26, 0
    %p116 = por %p114, %p115
    %s118 = sadd.s32 %s117, 1
    %p121 = scmp.eq.s32.totalorder %s20, 1
    %p122 = scmp.ne.s32.totalorder %s117, %s119
    %p123 = scmp.eq.s32.totalorder %s20, 0
    %p124 = por %p122, %p123
    %p125 = scmp.ne.s32.totalorder %s117, %s119
    %p126 = scmp.eq.s32.totalorder %s25, 1
    %p127 = por %p125, %p126
    %p128 = scmp.ne.s32.totalorder %s119, %s120
    %p129 = scmp.eq.s32.totalorder %s25, 0
    %p130 = por %p128, %p129
    %p131 = scmp.ne.s32.totalorder %s119, %s120
    %p132 = scmp.eq.s32.totalorder %s26, 1
    %p133 = por %p131, %p132
    %p135 = scmp.ne.s32.totalorder %s120, %s134
    %p136 = scmp.eq.s32.totalorder %s26, 0
    %p137 = por %p135, %p136
    %s139 = sadd.s32 %s138, 1
    %p142 = scmp.eq.s32.totalorder %s20, 1
    %p143 = scmp.ne.s32.totalorder %s138, %s140
    %p144 = scmp.eq.s32.totalorder %s20, 0
    %p145 = por %p143, %p144
    %p146 = scmp.ne.s32.totalorder %s138, %s140
    %p147 = scmp.eq.s32.totalorder %s25, 1
    %p148 = por %p146, %p147
    %p149 = scmp.ne.s32.totalorder %s140, %s141
    %p150 = scmp.eq.s32.totalorder %s25, 0
    %p151 = por %p149, %p150
    %p152 = scmp.ne.s32.totalorder %s140, %s141
    %p153 = scmp.eq.s32.totalorder %s26, 1
    %p154 = por %p152, %p153
    %p156 = scmp.ne.s32.totalorder %s141, %s155
    %p157 = scmp.eq.s32.totalorder %s26, 0
    %p158 = por %p156, %p157
    %s160 = sadd.s32 %s159, 1
    %p163 = scmp.eq.s32.totalorder %s20, 1
    %p164 = scmp.ne.s32.totalorder %s159, %s161
    %p165 = scmp.eq.s32.totalorder %s20, 0
    %p166 = por %p164, %p165
    %p167 = scmp.ne.s32.totalorder %s159, %s161
    %p168 = scmp.eq.s32.totalorder %s25, 1
    %p169 = por %p167, %p168
    %p170 = scmp.ne.s32.totalorder %s161, %s162
    %p171 = scmp.eq.s32.totalorder %s25, 0
    %p172 = por %p170, %p171
    %p173 = scmp.ne.s32.totalorder %s161, %s162
    %p174 = scmp.eq.s32.totalorder %s26, 1
    %p175 = por %p173, %p174
    %p177 = scmp.ne.s32.totalorder %s162, %s176
    %p178 = scmp.eq.s32.totalorder %s26, 0
    %p179 = por %p177, %p178
    %s181 = sadd.s32 %s180, 1
    %p184 = scmp.eq.s32.totalorder %s20, 1
    %p185 = scmp.ne.s32.totalorder %s180, %s182
    %p186 = scmp.eq.s32.totalorder %s20, 0
    %p187 = por %p185, %p186
    %p188 = scmp.ne.s32.totalorder %s180, %s182
    %p189 = scmp.eq.s32.totalorder %s25, 1
    %p190 = por %p188, %p189
    %p191 = scmp.ne.s32.totalorder %s182, %s183
    %p192 = scmp.eq.s32.totalorder %s25, 0
    %p193 = por %p191, %p192
    %p194 = scmp.ne.s32.totalorder %s182, %s183
    %p195 = scmp.eq.s32.totalorder %s26, 1
    %p196 = por %p194, %p195
    %p198 = scmp.ne.s32.totalorder %s183, %s197
    %p199 = scmp.eq.s32.totalorder %s26, 0
    %p200 = por %p198, %p199
    %s202 = sadd.s32 %s201, 1
    %p205 = scmp.eq.s32.totalorder %s20, 1
    %p206 = scmp.ne.s32.totalorder %s201, %s203
    %p207 = scmp.eq.s32.totalorder %s20, 0
    %p208 = por %p206, %p207
    %p209 = scmp.ne.s32.totalorder %s201, %s203
    %p210 = scmp.eq.s32.totalorder %s25, 1
    %p211 = por %p209, %p210
    %p212 = scmp.ne.s32.totalorder %s203, %s204
    %p213 = scmp.eq.s32.totalorder %s25, 0
    %p214 = por %p212, %p213
    %p215 = scmp.ne.s32.totalorder %s203, %s204
    %p216 = scmp.eq.s32.totalorder %s26, 1
    %p217 = por %p215, %p216
    %p219 = scmp.ne.s32.totalorder %s204, %s218
    %p220 = scmp.eq.s32.totalorder %s26, 0
    %p221 = por %p219, %p220
    %s223 = sadd.s32 %s222, 1
    %p226 = scmp.eq.s32.totalorder %s20, 1
    %p227 = scmp.ne.s32.totalorder %s222, %s224
    %p228 = scmp.eq.s32.totalorder %s20, 0
    %p229 = por %p227, %p228
    %p230 = scmp.ne.s32.totalorder %s222, %s224
    %p231 = scmp.eq.s32.totalorder %s25, 1
    %p232 = por %p230, %p231
    %p233 = scmp.ne.s32.totalorder %s224, %s225
    %p234 = scmp.eq.s32.totalorder %s25, 0
    %p235 = por %p233, %p234
    %p236 = scmp.ne.s32.totalorder %s224, %s225
    %p237 = scmp.eq.s32.totalorder %s26, 1
    %p238 = por %p236, %p237
    %p240 = scmp.ne.s32.totalorder %s225, %s239
    %p241 = scmp.eq.s32.totalorder %s26, 0
    %p242 = por %p240, %p241
    %s243 = ssub.s32 %s20, %s27
    %p244 = scmp.eq.s32.totalorder %s243, 0
    %s246 = sadd.s32 %s245, 1
    %s247 = scalar_select %p244, %s245, %s246
    %p250 = pneg %p244
    %p251 = scmp.eq.s32.totalorder %s20, 1
    %p252 = por %p250, %p251
    %p253 = scmp.ne.s32.totalorder %s245, %s248
    %p254 = scmp.eq.s32.totalorder %s20, 0
    %p255 = por %p253, %p254
    %p256 = scmp.ne.s32.totalorder %s245, %s248
    %p257 = scmp.eq.s32.totalorder %s25, 1
    %p258 = por %p256, %p257
    %p259 = scmp.ne.s32.totalorder %s248, %s249
    %p260 = scmp.eq.s32.totalorder %s25, 0
    %p261 = por %p259, %p260
    %p262 = scmp.ne.s32.totalorder %s248, %s249
    %p263 = scmp.eq.s32.totalorder %s26, 1
    %p264 = por %p262, %p263
    %p266 = scmp.ne.s32.totalorder %s249, %s265
    %p267 = scmp.eq.s32.totalorder %s26, 0
    %p268 = por %p266, %p267
    %p269 = scmp.le.s32.totalorder 1, %s20
    %p270 = scmp.lt.s32.totalorder %s20, 3
    %p271 = pnand %p269, %p270
    %p272 = pneg %p271
    // Predicated region
    $region9: #{simplified_depthwise_ca.1} parent=5 // pred_check
      _
    $region10: #{simplified_depthwise_ca.1} parent=5 // pred_check_branch
      %274 = sbr.rel (%p271) target = $region12
    $region11: #{simplified_depthwise_ca.1} parent=5 // pred_region
      %s275 = ssub.s32 %s20, 1
      // Predicated region
      $region13: #{simplified_depthwise_ca.1} parent=11 // pred_check
        %p276 = pneg %p67
      $region14: #{simplified_depthwise_ca.1} parent=11 // pred_check_branch
        %278 = sbr.rel (%p276) target = $region16
      $region15: #{simplified_depthwise_ca.1} parent=11 // pred_region
        _
      $region16: #{simplified_depthwise_ca.1} parent=11 // pred_fallthru
        _
      // Predicated region
      $region17: #{simplified_depthwise_ca.1} parent=11 // pred_check
        %p279 = pneg %p88
      $region18: #{simplified_depthwise_ca.1} parent=11 // pred_check_branch
        %281 = sbr.rel (%p279) target = $region20
      $region19: #{simplified_depthwise_ca.1} parent=11 // pred_region
        _
      $region20: #{simplified_depthwise_ca.1} parent=11 // pred_fallthru
        _
      // Predicated region
      $region21: #{simplified_depthwise_ca.1} parent=11 // pred_check
        %p282 = pneg %p109
      $region22: #{simplified_depthwise_ca.1} parent=11 // pred_check_branch
        %284 = sbr.rel (%p282) target = $region24
      $region23: #{simplified_depthwise_ca.1} parent=11 // pred_region
        _
      $region24: #{simplified_depthwise_ca.1} parent=11 // pred_fallthru
        _
      // Predicated region
      $region25: #{simplified_depthwise_ca.1} parent=11 // pred_check
        %p285 = pneg %p130
      $region26: #{simplified_depthwise_ca.1} parent=11 // pred_check_branch
        %287 = sbr.rel (%p285) target = $region28
      $region27: #{simplified_depthwise_ca.1} parent=11 // pred_region
        _
      $region28: #{simplified_depthwise_ca.1} parent=11 // pred_fallthru
        _
      // Predicated region
      $region29: #{simplified_depthwise_ca.1} parent=11 // pred_check
        %p288 = pneg %p151
      $region30: #{simplified_depthwise_ca.1} parent=11 // pred_check_branch
        %290 = sbr.rel (%p288) target = $region32
      $region31: #{simplified_depthwise_ca.1} parent=11 // pred_region
        _
      $region32: #{simplified_depthwise_ca.1} parent=11 // pred_fallthru
        _
      // Predicated region
      $region33: #{simplified_depthwise_ca.1} parent=11 // pred_check
        %p291 = pneg %p172
      $region34: #{simplified_depthwise_ca.1} parent=11 // pred_check_branch
        %293 = sbr.rel (%p291) target = $region36
      $region35: #{simplified_depthwise_ca.1} parent=11 // pred_region
        _
      $region36: #{simplified_depthwise_ca.1} parent=11 // pred_fallthru
        _
      // Predicated region
      $region37: #{simplified_depthwise_ca.1} parent=11 // pred_check
        %p294 = pneg %p193
      $region38: #{simplified_depthwise_ca.1} parent=11 // pred_check_branch
        %296 = sbr.rel (%p294) target = $region40
      $region39: #{simplified_depthwise_ca.1} parent=11 // pred_region
        _
      $region40: #{simplified_depthwise_ca.1} parent=11 // pred_fallthru
        _
      // Predicated region
      $region41: #{simplified_depthwise_ca.1} parent=11 // pred_check
        %p297 = pneg %p214
      $region42: #{simplified_depthwise_ca.1} parent=11 // pred_check_branch
        %299 = sbr.rel (%p297) target = $region44
      $region43: #{simplified_depthwise_ca.1} parent=11 // pred_region
        _
      $region44: #{simplified_depthwise_ca.1} parent=11 // pred_fallthru
        _
      // Predicated region
      $region45: #{simplified_depthwise_ca.1} parent=11 // pred_check
        %p300 = pneg %p235
      $region46: #{simplified_depthwise_ca.1} parent=11 // pred_check_branch
        %302 = sbr.rel (%p300) target = $region48
      $region47: #{simplified_depthwise_ca.1} parent=11 // pred_region
        _
      $region48: #{simplified_depthwise_ca.1} parent=11 // pred_fallthru
        _
    $region12: #{simplified_depthwise_ca.1} parent=5 // pred_fallthru
      _
    %p303 = scmp.lt.s32.totalorder %s20, 2
    // Predicated region
    $region49: #{simplified_depthwise_ca.1} parent=5 // pred_check
      %p304 = pneg %p303
    $region50: #{simplified_depthwise_ca.1} parent=5 // pred_check_branch
      %306 = sbr.rel (%p304) target = $region52
    $region51: #{simplified_depthwise_ca.1} parent=5 // pred_region
      // Predicated region
      $region53: #{simplified_depthwise_ca.1} parent=51 // pred_check
        %p307 = pneg %p40
      $region54: #{simplified_depthwise_ca.1} parent=51 // pred_check_branch
        %309 = sbr.rel (%p307) target = $region56
      $region55: #{simplified_depthwise_ca.1} parent=51 // pred_region
        %p310 = scmp.lt.s32.totalorder %s20, 1
        %s311 = scalar_select %p310, %s20, 1
        %s312 = smul.addr %s311, 2
        %s313 = smul.addr %s312, 8
        %s314 = scalar_lea.vmem %s0, %s313
      $region56: #{simplified_depthwise_ca.1} parent=51 // pred_fallthru
        _
    $region52: #{simplified_depthwise_ca.1} parent=5 // pred_fallthru
      _
    %p315 = scmp.le.s32.totalorder 1, %s20
    %p316 = scmp.lt.s32.totalorder %s20, 3
    %p317 = pnand %p315, %p316
    %p318 = pneg %p317
    // Predicated region
    $region57: #{simplified_depthwise_ca.1} parent=5 // pred_check
      _
    $region58: #{simplified_depthwise_ca.1} parent=5 // pred_check_branch
      %320 = sbr.rel (%p317) target = $region60
    $region59: #{simplified_depthwise_ca.1} parent=5 // pred_region
      %s321 = ssub.s32 %s20, 1
      %p322 = scmp.lt.s32.totalorder %s25, 1
      %s323 = scalar_select %p322, %s25, 1
      %s324 = smul.addr %s323, 2
      %s325 = smul.addr %s324, 8
      %s326 = scalar_lea.vmem %s0, %s325
      %p327 = pneg %p46
      %p328 = pneg %p43
      %p329 = pneg %p67
      %p330 = pneg %p64
      %p331 = pneg %p88
      %p332 = pneg %p85
      %p333 = pneg %p109
      %p334 = pneg %p106
      %p335 = pneg %p130
      %p336 = pneg %p127
      %p337 = pneg %p151
      %p338 = pneg %p148
      %p339 = pneg %p172
      %p340 = pneg %p169
      %p341 = pneg %p193
      %p342 = pneg %p190
      %p343 = pneg %p214
      %p344 = pneg %p211
      %p345 = pneg %p235
      %p346 = pneg %p232
      %p347 = pneg %p261
      %p348 = pneg %p258
      %p349 = scmp.lt.s32.totalorder %s25, 1
      %s350 = scalar_select %p349, %s25, 1
      %s351 = smul.addr %s350, 2
      %s352 = smul.addr %s351, 8
      %s353 = scalar_lea.vmem %s10, %s352
      %p354 = scmp.lt.s32.totalorder %s25, 1
      %s355 = scalar_select %p354, %s25, 1
      %s356 = smul.addr %s355, 2
      %s357 = smul.addr %s356, 8
      %s358 = scalar_lea.vmem %s0, %s357
      %p359 = scmp.lt.s32.totalorder %s25, 1
      %s360 = scalar_select %p359, %s25, 1
      %s361 = smul.addr %s360, 2
      %s362 = smul.addr %s361, 8
      %s363 = scalar_lea.vmem %s10, %s362
      %v364 = vld [vmem:[%s358] sm:$0xff]
      %v365 = vld [vmem:[%s358 + $0x8] sm:$0xff]
      %v367 = vrot.slane %v364, 1
      %vm370 = vcmask 1040384
      %v371 = vrot.slane %v364, 7
      %v372 = vrot.slane %v365, 7
      %v373 = vsel %vm370, %v371, %v372
      %v377 = vrot.slane %v365, 5
      %v379 = vsel %vm370, %v367, %v371
      %v380 = vsel %vm370, %v372, %v377
      %v381 = vld [vmem:[%s1] sm:$0xff]
      %v382 = vld [vmem:[%s1 + $0x8] sm:$0xff]
      %v383 = vld [vmem:[%s1 + $0x10] sm:$0xff]
      %v384 = vld [vmem:[%s1 + $0x18] sm:$0xff]
      %v385 = vld [vmem:[%s1 + $0x20] sm:$0xff]
      %v386 = vld [vmem:[%s1 + $0x28] sm:$0xff]
      %v387 = vld [vmem:[%s1 + $0x30] sm:$0xff]
      %v388 = vld [vmem:[%s1 + $0x38] sm:$0xff]
      %v389 = vld [vmem:[%s1 + $0x40] sm:$0xff]
      %v390 = vld [vmem:[%s1 + $0x48] sm:$0xff]
      %v391 = vld [vmem:[%s1 + $0x50] sm:$0xff]
      %v392 = vld [vmem:[%s1 + $0x58] sm:$0xff]
      %v393 = vld [vmem:[%s1 + $0x60] sm:$0xff]
      %v394 = vld [vmem:[%s1 + $0x68] sm:$0xff]
      %v395 = vld [vmem:[%s1 + $0x70] sm:$0xff]
      %v396 = vld [vmem:[%s1 + $0x78] sm:$0xff]
      %s397 = scalar_lea.vmem %s1, 128
      %v398 = vld [vmem:[%s397] sm:$0xff]
      %v399 = vld [vmem:[%s397 + $0x8] sm:$0xff]
      %v400 = vld [vmem:[%s397 + $0x10] sm:$0xff]
      %v401 = vld [vmem:[%s397 + $0x18] sm:$0xff]
      %v402 = vld [vmem:[%s397 + $0x20] sm:$0xff]
      %v403 = vld [vmem:[%s397 + $0x28] sm:$0xff]
      %v404 = vld [vmem:[%s397 + $0x30] sm:$0xff]
      %v405 = vld [vmem:[%s397 + $0x38] sm:$0xff]
      %v406 = vld [vmem:[%s397 + $0x40] sm:$0xff]
      %v407 = vld [vmem:[%s397 + $0x48] sm:$0xff]
      %v408 = vld [vmem:[%s397 + $0x50] sm:$0xff]
      %v409 = vld [vmem:[%s397 + $0x58] sm:$0xff]
      %v410 = vld [vmem:[%s397 + $0x60] sm:$0xff]
      %v411 = vld [vmem:[%s397 + $0x68] sm:$0xff]
      %v412 = vld [vmem:[%s397 + $0x70] sm:$0xff]
      %v413 = vld [vmem:[%s397 + $0x78] sm:$0xff]
      %vm416 = vcmask 1046528
      %v417 = vrot.slane %v379, 1
      %v418 = vrot.slane %v373, 1
      %v419 = vsel %vm416, %v417, %v418
      %v420 = vrot.slane %v380, 1
      %v421 = vsel %vm416, %v418, %v420
      %424 = vmatprep.subr.mxu0 0.0
      %425 = vmatpush1.msra.mxu0 %v398
      %426 = vmatprep.subr.mxu0 0.0
      %427 = vmatpush1.msra.mxu0 %v399
      %428 = vmatprep.subr.mxu0 0.0
      %429 = vmatpush1.msra.mxu0 %v400
      %430 = vmatprep.subr.mxu0 0.0
      %431 = vmatpush1.msra.mxu0 %v401
      %432 = vmatprep.subr.mxu0 0.0
      %433 = vmatpush1.msra.mxu0 %v402
      %434 = vmatprep.subr.mxu0 0.0
      %435 = vmatpush1.msra.mxu0 %v403
      %436 = vmatprep.subr.mxu0 0.0
      %437 = vmatpush1.msra.mxu0 %v404
      %438 = vmatprep.subr.mxu0 0.0
      %439 = vmatpush1.msra.mxu0 %v405
      %440 = vmatprep.subr.mxu0 0.0
      %441 = vmatpush1.msra.mxu0 %v406
      %442 = vmatprep.subr.mxu0 0.0
      %443 = vmatpush1.msra.mxu0 %v407
      %444 = vmatprep.subr.mxu0 0.0
      %445 = vmatpush1.msra.mxu0 %v408
      %446 = vmatprep.subr.mxu0 0.0
      %447 = vmatpush1.msra.mxu0 %v409
      %448 = vmatprep.subr.mxu0 0.0
      %449 = vmatpush1.msra.mxu0 %v410
      %450 = vmatprep.subr.mxu0 0.0
      %451 = vmatpush1.msra.mxu0 %v411
      %452 = vmatprep.subr.mxu0 0.0
      %453 = vmatpush1.msra.mxu0 %v412
      %454 = vmatprep.subr.mxu0 0.0
      %455 = vmatpush1.msra.mxu0 %v413
      %456 = vmatprep.subr.mxu0 0.0
      %457 = vmatpush1.msra.mxu0 0.0
      %458 = vmatprep.subr.mxu0 0.0
      %459 = vmatpush1.msra.mxu0 0.0
      %460 = vmatprep.subr.mxu0 0.0
      %461 = vmatpush1.msra.mxu0 0.0
      %462 = vmatprep.subr.mxu0 0.0
      %463 = vmatpush1.msra.mxu0 0.0
      %464 = vmatprep.subr.mxu0 0.0
      %465 = vmatpush1.msra.mxu0 0.0
      %466 = vmatprep.subr.mxu0 0.0
      %467 = vmatpush1.msra.mxu0 0.0
      %468 = vmatprep.subr.mxu0 0.0
      %469 = vmatpush1.msra.mxu0 0.0
      %470 = vmatprep.subr.mxu0 0.0
      %471 = vmatpush1.msra.mxu0 0.0
      %472 = vmatprep.subr.mxu0 0.0
      %473 = vmatpush1.msra.mxu0 0.0
      %474 = vmatprep.subr.mxu0 0.0
      %475 = vmatpush1.msra.mxu0 0.0
      %476 = vmatprep.subr.mxu0 0.0
      %477 = vmatpush1.msra.mxu0 0.0
      %478 = vmatprep.subr.mxu0 0.0
      %479 = vmatpush1.msra.mxu0 0.0
      %480 = vmatprep.subr.mxu0 0.0
      %481 = vmatpush1.msra.mxu0 0.0
      %482 = vmatprep.subr.mxu0 0.0
      %483 = vmatpush1.msra.mxu0 0.0
      %484 = vmatprep.subr.mxu0 0.0
      %485 = vmatpush1.msra.mxu0 0.0
      %486 = vmatprep.subr.mxu0 0.0
      %487 = vmatpush1.msra.mxu0 0.0
      %488 = vmatprep.mubr.f32.mxu0 0.0
      %489 = vmatmul.mubr.f32.gmra.mrb[0].mxu0 %v419
      %v490 = vpop.f32.mrb[0].mxu0
      %v491 = vadd.f32 0.0, %v490
      %v492 = vpop.f32.mrb[0].mxu0
      %493 = vmatprep.mubr.f32.mxu0 0.0
      %494 = vmatmul.mubr.f32.gmra.mrb[0].mxu0 %v421
      %v495 = vpop.f32.mrb[0].mxu0
      %v496 = vadd.f32 0.0, %v495
      %v497 = vpop.f32.mrb[0].mxu0
      %498 = vdwg.mxu0
      %499 = vmatprep.subr.mxu0 0.0
      %500 = vmatpush1.msra.mxu0 %v381
      %501 = vmatprep.subr.mxu0 0.0
      %502 = vmatpush1.msra.mxu0 %v382
      %503 = vmatprep.subr.mxu0 0.0
      %504 = vmatpush1.msra.mxu0 %v383
      %505 = vmatprep.subr.mxu0 0.0
      %506 = vmatpush1.msra.mxu0 %v384
      %507 = vmatprep.subr.mxu0 0.0
      %508 = vmatpush1.msra.mxu0 %v385
      %509 = vmatprep.subr.mxu0 0.0
      %510 = vmatpush1.msra.mxu0 %v386
      %511 = vmatprep.subr.mxu0 0.0
      %512 = vmatpush1.msra.mxu0 %v387
      %513 = vmatprep.subr.mxu0 0.0
      %514 = vmatpush1.msra.mxu0 %v388
      %515 = vmatprep.subr.mxu0 0.0
      %516 = vmatpush1.msra.mxu0 %v389
      %517 = vmatprep.subr.mxu0 0.0
      %518 = vmatpush1.msra.mxu0 %v390
      %519 = vmatprep.subr.mxu0 0.0
      %520 = vmatpush1.msra.mxu0 %v391
      %521 = vmatprep.subr.mxu0 0.0
      %522 = vmatpush1.msra.mxu0 %v392
      %523 = vmatprep.subr.mxu0 0.0
      %524 = vmatpush1.msra.mxu0 %v393
      %525 = vmatprep.subr.mxu0 0.0
      %526 = vmatpush1.msra.mxu0 %v394
      %527 = vmatprep.subr.mxu0 0.0
      %528 = vmatpush1.msra.mxu0 %v395
      %529 = vmatprep.subr.mxu0 0.0
      %530 = vmatpush1.msra.mxu0 %v396
      %531 = vmatprep.subr.mxu0 0.0
      %532 = vmatpush1.msra.mxu0 0.0
      %533 = vmatprep.subr.mxu0 0.0
      %534 = vmatpush1.msra.mxu0 0.0
      %535 = vmatprep.subr.mxu0 0.0
      %536 = vmatpush1.msra.mxu0 0.0
      %537 = vmatprep.subr.mxu0 0.0
      %538 = vmatpush1.msra.mxu0 0.0
      %539 = vmatprep.subr.mxu0 0.0
      %540 = vmatpush1.msra.mxu0 0.0
      %541 = vmatprep.subr.mxu0 0.0
      %542 = vmatpush1.msra.mxu0 0.0
      %543 = vmatprep.subr.mxu0 0.0
      %544 = vmatpush1.msra.mxu0 0.0
      %545 = vmatprep.subr.mxu0 0.0
      %546 = vmatpush1.msra.mxu0 0.0
      %547 = vmatprep.subr.mxu0 0.0
      %548 = vmatpush1.msra.mxu0 0.0
      %549 = vmatprep.subr.mxu0 0.0
      %550 = vmatpush1.msra.mxu0 0.0
      %551 = vmatprep.subr.mxu0 0.0
      %552 = vmatpush1.msra.mxu0 0.0
      %553 = vmatprep.subr.mxu0 0.0
      %554 = vmatpush1.msra.mxu0 0.0
      %555 = vmatprep.subr.mxu0 0.0
      %556 = vmatpush1.msra.mxu0 0.0
      %557 = vmatprep.subr.mxu0 0.0
      %558 = vmatpush1.msra.mxu0 0.0
      %559 = vmatprep.subr.mxu0 0.0
      %560 = vmatpush1.msra.mxu0 0.0
      %561 = vmatprep.subr.mxu0 0.0
      %562 = vmatpush1.msra.mxu0 0.0
      %563 = vmatprep.mubr.f32.mxu0 0.0
      %564 = vmatmul.mubr.f32.gmra.mrb[0].mxu0 %v379
      %v565 = vpop.f32.mrb[0].mxu0
      %v566 = vadd.f32 %v491, %v565
      %v567 = vpop.f32.mrb[0].mxu0
      %568 = vmatprep.mubr.f32.mxu0 0.0
      %569 = vmatmul.mubr.f32.gmra.mrb[0].mxu0 %v373
      %v570 = vpop.f32.mrb[0].mxu0
      %v571 = vadd.f32 %v496, %v570
      %v572 = vpop.f32.mrb[0].mxu0
      %573 = vdwg.mxu0
      %s574 = scalar_lea.vmem %s1, 256
      %v575 = vld [vmem:[%s574] sm:$0xff]
      %v576 = vld [vmem:[%s574 + $0x8] sm:$0xff]
      %v577 = vld [vmem:[%s574 + $0x10] sm:$0xff]
      %v578 = vld [vmem:[%s574 + $0x18] sm:$0xff]
      %v579 = vld [vmem:[%s574 + $0x20] sm:$0xff]
      %v580 = vld [vmem:[%s574 + $0x28] sm:$0xff]
      %v581 = vld [vmem:[%s574 + $0x30] sm:$0xff]
      %v582 = vld [vmem:[%s574 + $0x38] sm:$0xff]
      %v583 = vld [vmem:[%s574 + $0x40] sm:$0xff]
      %v584 = vld [vmem:[%s574 + $0x48] sm:$0xff]
      %v585 = vld [vmem:[%s574 + $0x50] sm:$0xff]
      %v586 = vld [vmem:[%s574 + $0x58] sm:$0xff]
      %v587 = vld [vmem:[%s574 + $0x60] sm:$0xff]
      %v588 = vld [vmem:[%s574 + $0x68] sm:$0xff]
      %v589 = vld [vmem:[%s574 + $0x70] sm:$0xff]
      %v590 = vld [vmem:[%s574 + $0x78] sm:$0xff]
      %vm591 = vcmask 1045504
      %v592 = vrot.slane %v379, 2
      %v593 = vrot.slane %v373, 2
      %v594 = vsel %vm591, %v592, %v593
      %v595 = vrot.slane %v380, 2
      %v596 = vsel %vm591, %v593, %v595
      %599 = vmatprep.subr.mxu0 0.0
      %600 = vmatpush1.msra.mxu0 %v575
      %601 = vmatprep.subr.mxu0 0.0
      %602 = vmatpush1.msra.mxu0 %v576
      %603 = vmatprep.subr.mxu0 0.0
      %604 = vmatpush1.msra.mxu0 %v577
      %605 = vmatprep.subr.mxu0 0.0
      %606 = vmatpush1.msra.mxu0 %v578
      %607 = vmatprep.subr.mxu0 0.0
      %608 = vmatpush1.msra.mxu0 %v579
      %609 = vmatprep.subr.mxu0 0.0
      %610 = vmatpush1.msra.mxu0 %v580
      %611 = vmatprep.subr.mxu0 0.0
      %612 = vmatpush1.msra.mxu0 %v581
      %613 = vmatprep.subr.mxu0 0.0
      %614 = vmatpush1.msra.mxu0 %v582
      %615 = vmatprep.subr.mxu0 0.0
      %616 = vmatpush1.msra.mxu0 %v583
      %617 = vmatprep.subr.mxu0 0.0
      %618 = vmatpush1.msra.mxu0 %v584
      %619 = vmatprep.subr.mxu0 0.0
      %620 = vmatpush1.msra.mxu0 %v585
      %621 = vmatprep.subr.mxu0 0.0
      %622 = vmatpush1.msra.mxu0 %v586
      %623 = vmatprep.subr.mxu0 0.0
      %624 = vmatpush1.msra.mxu0 %v587
      %625 = vmatprep.subr.mxu0 0.0
      %626 = vmatpush1.msra.mxu0 %v588
      %627 = vmatprep.subr.mxu0 0.0
      %628 = vmatpush1.msra.mxu0 %v589
      %629 = vmatprep.subr.mxu0 0.0
      %630 = vmatpush1.msra.mxu0 %v590
      %631 = vmatprep.subr.mxu0 0.0
      %632 = vmatpush1.msra.mxu0 0.0
      %633 = vmatprep.subr.mxu0 0.0
      %634 = vmatpush1.msra.mxu0 0.0
      %635 = vmatprep.subr.mxu0 0.0
      %636 = vmatpush1.msra.mxu0 0.0
      %637 = vmatprep.subr.mxu0 0.0
      %638 = vmatpush1.msra.mxu0 0.0
      %639 = vmatprep.subr.mxu0 0.0
      %640 = vmatpush1.msra.mxu0 0.0
      %641 = vmatprep.subr.mxu0 0.0
      %642 = vmatpush1.msra.mxu0 0.0
      %643 = vmatprep.subr.mxu0 0.0
      %644 = vmatpush1.msra.mxu0 0.0
      %645 = vmatprep.subr.mxu0 0.0
      %646 = vmatpush1.msra.mxu0 0.0
      %647 = vmatprep.subr.mxu0 0.0
      %648 = vmatpush1.msra.mxu0 0.0
      %649 = vmatprep.subr.mxu0 0.0
      %650 = vmatpush1.msra.mxu0 0.0
      %651 = vmatprep.subr.mxu0 0.0
      %652 = vmatpush1.msra.mxu0 0.0
      %653 = vmatprep.subr.mxu0 0.0
      %654 = vmatpush1.msra.mxu0 0.0
      %655 = vmatprep.subr.mxu0 0.0
      %656 = vmatpush1.msra.mxu0 0.0
      %657 = vmatprep.subr.mxu0 0.0
      %658 = vmatpush1.msra.mxu0 0.0
      %659 = vmatprep.subr.mxu0 0.0
      %660 = vmatpush1.msra.mxu0 0.0
      %661 = vmatprep.subr.mxu0 0.0
      %662 = vmatpush1.msra.mxu0 0.0
      %663 = vmatprep.mubr.f32.mxu0 0.0
      %664 = vmatmul.mubr.f32.gmra.mrb[0].mxu0 %v594
      %v665 = vpop.f32.mrb[0].mxu0
      %v666 = vadd.f32 0.0, %v665
      %v667 = vpop.f32.mrb[0].mxu0
      %668 = vmatprep.mubr.f32.mxu0 0.0
      %669 = vmatmul.mubr.f32.gmra.mrb[0].mxu0 %v596
      %v670 = vpop.f32.mrb[0].mxu0
      %v671 = vadd.f32 0.0, %v670
      %v672 = vpop.f32.mrb[0].mxu0
      %673 = vdwg.mxu0
      %v674 = vadd.f32 %v566, %v666
      %v675 = vadd.f32 %v571, %v671
      %v676 = vld [vmem:[%s2] sm:$0x1]
      %v678 = vlaneseq
      %v679 = vshrl.u32 %v678, 7
      %v680 = vsub.s32 0, %v679
      %v681 = vrot.slane %v676, %v680
      %v683 = vadd.f32 %v674, %v681
      %v684 = vadd.f32 %v675, %v681
      %v685 = vadd.f32 %v683, %v684
      %v686 = vrot.slane %v685, 4
      %v687 = vadd.f32 %v685, %v686
      %v688 = vrot.slane %v687, 2
      %v689 = vadd.f32 %v687, %v688
      %v690 = vrot.slane %v689, 1
      %v691 = vadd.f32 %v689, %v690
      %v692 = vld [vmem:[%s3] sm:$0xff]
      %v693 = vld [vmem:[%s3 + $0x8] sm:$0xff]
      %v694 = vld [vmem:[%s3 + $0x10] sm:$0xff]
      %v695 = vld [vmem:[%s3 + $0x18] sm:$0xff]
      %v696 = vld [vmem:[%s3 + $0x20] sm:$0xff]
      %v697 = vld [vmem:[%s3 + $0x28] sm:$0xff]
      %v698 = vld [vmem:[%s3 + $0x30] sm:$0xff]
      %v699 = vld [vmem:[%s3 + $0x38] sm:$0xff]
      %v700 = vld [vmem:[%s3 + $0x40] sm:$0xff]
      %v701 = vld [vmem:[%s3 + $0x48] sm:$0xff]
      %v702 = vld [vmem:[%s3 + $0x50] sm:$0xff]
      %v703 = vld [vmem:[%s3 + $0x58] sm:$0xff]
      %v704 = vld [vmem:[%s3 + $0x60] sm:$0xff]
      %v705 = vld [vmem:[%s3 + $0x68] sm:$0xff]
      %v706 = vld [vmem:[%s3 + $0x70] sm:$0xff]
      %v707 = vld [vmem:[%s3 + $0x78] sm:$0xff]
      %708 = vmatprep.subr.mxu0 0.0
      %709 = vmatpush1.msra.mxu0 %v692
      %710 = vmatprep.subr.mxu0 0.0
      %711 = vmatpush1.msra.mxu0 %v693
      %712 = vmatprep.subr.mxu0 0.0
      %713 = vmatpush1.msra.mxu0 %v694
      %714 = vmatprep.subr.mxu0 0.0
      %715 = vmatpush1.msra.mxu0 %v695
      %716 = vmatprep.subr.mxu0 0.0
      %717 = vmatpush1.msra.mxu0 %v696
      %718 = vmatprep.subr.mxu0 0.0
      %719 = vmatpush1.msra.mxu0 %v697
      %720 = vmatprep.subr.mxu0 0.0
      %721 = vmatpush1.msra.mxu0 %v698
      %722 = vmatprep.subr.mxu0 0.0
      %723 = vmatpush1.msra.mxu0 %v699
      %724 = vmatprep.subr.mxu0 0.0
      %725 = vmatpush1.msra.mxu0 %v700
      %726 = vmatprep.subr.mxu0 0.0
      %727 = vmatpush1.msra.mxu0 %v701
      %728 = vmatprep.subr.mxu0 0.0
      %729 = vmatpush1.msra.mxu0 %v702
      %730 = vmatprep.subr.mxu0 0.0
      %731 = vmatpush1.msra.mxu0 %v703
      %732 = vmatprep.subr.mxu0 0.0
      %733 = vmatpush1.msra.mxu0 %v704
      %734 = vmatprep.subr.mxu0 0.0
      %735 = vmatpush1.msra.mxu0 %v705
      %736 = vmatprep.subr.mxu0 0.0
      %737 = vmatpush1.msra.mxu0 %v706
      %738 = vmatprep.subr.mxu0 0.0
      %739 = vmatpush1.msra.mxu0 %v707
      %740 = vmatprep.subr.mxu0 0.0
      %741 = vmatpush1.msra.mxu0 0.0
      %742 = vmatprep.subr.mxu0 0.0
      %743 = vmatpush1.msra.mxu0 0.0
      %744 = vmatprep.subr.mxu0 0.0
      %745 = vmatpush1.msra.mxu0 0.0
      %746 = vmatprep.subr.mxu0 0.0
      %747 = vmatpush1.msra.mxu0 0.0
      %748 = vmatprep.subr.mxu0 0.0
      %749 = vmatpush1.msra.mxu0 0.0
      %750 = vmatprep.subr.mxu0 0.0
      %751 = vmatpush1.msra.mxu0 0.0
      %752 = vmatprep.subr.mxu0 0.0
      %753 = vmatpush1.msra.mxu0 0.0
      %754 = vmatprep.subr.mxu0 0.0
      %755 = vmatpush1.msra.mxu0 0.0
      %756 = vmatprep.subr.mxu0 0.0
      %757 = vmatpush1.msra.mxu0 0.0
      %758 = vmatprep.subr.mxu0 0.0
      %759 = vmatpush1.msra.mxu0 0.0
      %760 = vmatprep.subr.mxu0 0.0
      %761 = vmatpush1.msra.mxu0 0.0
      %762 = vmatprep.subr.mxu0 0.0
      %763 = vmatpush1.msra.mxu0 0.0
      %764 = vmatprep.subr.mxu0 0.0
      %765 = vmatpush1.msra.mxu0 0.0
      %766 = vmatprep.subr.mxu0 0.0
      %767 = vmatpush1.msra.mxu0 0.0
      %768 = vmatprep.subr.mxu0 0.0
      %769 = vmatpush1.msra.mxu0 0.0
      %770 = vmatprep.subr.mxu0 0.0
      %771 = vmatpush1.msra.mxu0 0.0
      %772 = vmatprep.mubr.f32.mxu0 0.0
      %773 = vmatmul.mubr.f32.gmra.mrb[0].mxu0 %v691
      %v774 = vpop.f32.mrb[0].mxu0
      %v775 = vadd.f32 0.0, %v774
      %v776 = vpop.f32.mrb[0].mxu0
      %777 = vdwg.mxu0
      %v778 = vld [vmem:[%s4] sm:$0xff]
      %v779 = vld [vmem:[#allocation2] sm:$0x1]
      %vm780 = vcmask 64512
      %v782 = vsel %vm780, %v775, 0
      %784 = vmatprep.subr.mxu0 0.0
      %785 = vmatpush1.msra.mxu0 %v778
      %786 = vmatprep.subr.mxu0 0.0
      %787 = vmatpush1.msra.mxu0 0.0
      %788 = vmatprep.subr.mxu0 0.0
      %789 = vmatpush1.msra.mxu0 0.0
      %790 = vmatprep.subr.mxu0 0.0
      %791 = vmatpush1.msra.mxu0 0.0
      %792 = vmatprep.subr.mxu0 0.0
      %793 = vmatpush1.msra.mxu0 0.0
      %794 = vmatprep.subr.mxu0 0.0
      %795 = vmatpush1.msra.mxu0 0.0
      %796 = vmatprep.subr.mxu0 0.0
      %797 = vmatpush1.msra.mxu0 0.0
      %798 = vmatprep.subr.mxu0 0.0
      %799 = vmatpush1.msra.mxu0 0.0
      %800 = vmatprep.subr.mxu0 0.0
      %801 = vmatpush1.msra.mxu0 0.0
      %802 = vmatprep.subr.mxu0 0.0
      %803 = vmatpush1.msra.mxu0 0.0
      %804 = vmatprep.subr.mxu0 0.0
      %805 = vmatpush1.msra.mxu0 0.0
      %806 = vmatprep.subr.mxu0 0.0
      %807 = vmatpush1.msra.mxu0 0.0
      %808 = vmatprep.subr.mxu0 0.0
      %809 = vmatpush1.msra.mxu0 0.0
      %810 = vmatprep.subr.mxu0 0.0
      %811 = vmatpush1.msra.mxu0 0.0
      %812 = vmatprep.subr.mxu0 0.0
      %813 = vmatpush1.msra.mxu0 0.0
      %814 = vmatprep.subr.mxu0 0.0
      %815 = vmatpush1.msra.mxu0 0.0
      %816 = vmatprep.subr.mxu0 0.0
      %817 = vmatpush1.msra.mxu0 0.0
      %818 = vmatprep.subr.mxu0 0.0
      %819 = vmatpush1.msra.mxu0 0.0
      %820 = vmatprep.subr.mxu0 0.0
      %821 = vmatpush1.msra.mxu0 0.0
      %822 = vmatprep.subr.mxu0 0.0
      %823 = vmatpush1.msra.mxu0 0.0
      %824 = vmatprep.subr.mxu0 0.0
      %825 = vmatpush1.msra.mxu0 0.0
      %826 = vmatprep.subr.mxu0 0.0
      %827 = vmatpush1.msra.mxu0 0.0
      %828 = vmatprep.subr.mxu0 0.0
      %829 = vmatpush1.msra.mxu0 0.0
      %830 = vmatprep.subr.mxu0 0.0
      %831 = vmatpush1.msra.mxu0 0.0
      %832 = vmatprep.subr.mxu0 0.0
      %833 = vmatpush1.msra.mxu0 0.0
      %834 = vmatprep.subr.mxu0 0.0
      %835 = vmatpush1.msra.mxu0 0.0
      %836 = vmatprep.subr.mxu0 0.0
      %837 = vmatpush1.msra.mxu0 0.0
      %838 = vmatprep.subr.mxu0 0.0
      %839 = vmatpush1.msra.mxu0 0.0
      %840 = vmatprep.subr.mxu0 0.0
      %841 = vmatpush1.msra.mxu0 0.0
      %842 = vmatprep.subr.mxu0 0.0
      %843 = vmatpush1.msra.mxu0 0.0
      %844 = vmatprep.subr.mxu0 0.0
      %845 = vmatpush1.msra.mxu0 0.0
      %846 = vmatprep.subr.mxu0 0.0
      %847 = vmatpush1.msra.mxu0 0.0
      %848 = vmatprep.mubr.f32.mxu0 0.0
      %849 = vmatmul.mubr.f32.gmra.mrb[0].mxu0 %v782
      %v850 = vpop.f32.mrb[0].mxu0
      %v851 = vadd.f32 %v779, %v850
      %v852 = vpop.f32.mrb[0].mxu0
      %853 = vdwg.mxu0
      %vm854 = vcmp.ge.f32.partialorder %v851, 0.0
      %v855 = vld [vmem:[#allocation3] sm:$0x1]
      %v856 = vmul.f32 %v855, %v851
      %v857 = vsel %vm854, %v851, %v856
      %v858 = vld [vmem:[%s7] sm:$0x1]
      %v859 = vld [vmem:[%s8] sm:$0x1]
      %vm860 = vcmask 7168
      %v862 = vsel %vm860, %v857, 0
      %v865 = vsel %vm370, %v858, 0
      %867 = vmatprep.subr.mxu0 0.0
      %868 = vmatpush1.msra.mxu0 %v865
      %869 = vmatprep.subr.mxu0 0.0
      %870 = vmatpush1.msra.mxu0 0.0
      %871 = vmatprep.subr.mxu0 0.0
      %872 = vmatpush1.msra.mxu0 0.0
      %873 = vmatprep.subr.mxu0 0.0
      %874 = vmatpush1.msra.mxu0 0.0
      %875 = vmatprep.subr.mxu0 0.0
      %876 = vmatpush1.msra.mxu0 0.0
      %877 = vmatprep.subr.mxu0 0.0
      %878 = vmatpush1.msra.mxu0 0.0
      %879 = vmatprep.subr.mxu0 0.0
      %880 = vmatpush1.msra.mxu0 0.0
      %881 = vmatprep.subr.mxu0 0.0
      %882 = vmatpush1.msra.mxu0 0.0
      %883 = vmatprep.subr.mxu0 0.0
      %884 = vmatpush1.msra.mxu0 0.0
      %885 = vmatprep.subr.mxu0 0.0
      %886 = vmatpush1.msra.mxu0 0.0
      %887 = vmatprep.subr.mxu0 0.0
      %888 = vmatpush1.msra.mxu0 0.0
      %889 = vmatprep.subr.mxu0 0.0
      %890 = vmatpush1.msra.mxu0 0.0
      %891 = vmatprep.subr.mxu0 0.0
      %892 = vmatpush1.msra.mxu0 0.0
      %893 = vmatprep.subr.mxu0 0.0
      %894 = vmatpush1.msra.mxu0 0.0
      %895 = vmatprep.subr.mxu0 0.0
      %896 = vmatpush1.msra.mxu0 0.0
      %897 = vmatprep.subr.mxu0 0.0
      %898 = vmatpush1.msra.mxu0 0.0
      %899 = vmatprep.subr.mxu0 0.0
      %900 = vmatpush1.msra.mxu0 0.0
      %901 = vmatprep.subr.mxu0 0.0
      %902 = vmatpush1.msra.mxu0 0.0
      %903 = vmatprep.subr.mxu0 0.0
      %904 = vmatpush1.msra.mxu0 0.0
      %905 = vmatprep.subr.mxu0 0.0
      %906 = vmatpush1.msra.mxu0 0.0
      %907 = vmatprep.subr.mxu0 0.0
      %908 = vmatpush1.msra.mxu0 0.0
      %909 = vmatprep.subr.mxu0 0.0
      %910 = vmatpush1.msra.mxu0 0.0
      %911 = vmatprep.subr.mxu0 0.0
      %912 = vmatpush1.msra.mxu0 0.0
      %913 = vmatprep.subr.mxu0 0.0
      %914 = vmatpush1.msra.mxu0 0.0
      %915 = vmatprep.subr.mxu0 0.0
      %916 = vmatpush1.msra.mxu0 0.0
      %917 = vmatprep.subr.mxu0 0.0
      %918 = vmatpush1.msra.mxu0 0.0
      %919 = vmatprep.subr.mxu0 0.0
      %920 = vmatpush1.msra.mxu0 0.0
      %921 = vmatprep.subr.mxu0 0.0
      %922 = vmatpush1.msra.mxu0 0.0
      %923 = vmatprep.subr.mxu0 0.0
      %924 = vmatpush1.msra.mxu0 0.0
      %925 = vmatprep.subr.mxu0 0.0
      %926 = vmatpush1.msra.mxu0 0.0
      %927 = vmatprep.subr.mxu0 0.0
      %928 = vmatpush1.msra.mxu0 0.0
      %929 = vmatprep.subr.mxu0 0.0
      %930 = vmatpush1.msra.mxu0 0.0
      %931 = vmatprep.mubr.f32.mxu0 0.0
      %932 = vmatmul.mubr.f32.gmra.mrb[0].mxu0 %v862
      %v933 = vpop.f32.mrb[0].mxu0
      %v934 = vadd.f32 %v859, %v933
      %v935 = vpop.f32.mrb[0].mxu0
      %936 = vdwg.mxu0
      %v937 = vxor.u32 %v934, 2147483648
      %v938 = vmul.f32 %v937, 1.442695
      %v939 = vpow.pop %v938
      %v940 = vadd.f32 %v939, 1.0
      %v941 = vrcp.pop %v940
      %v942 = vmul.f32 1.0, %v941
      %v943 = vld [vmem:[%s9] sm:$0xff]
      %v945 = vsel %vm780, %v942, 0
      %947 = vmatprep.subr.mxu0 0.0
      %948 = vmatpush1.msra.mxu0 %v943
      %949 = vmatprep.subr.mxu0 0.0
      %950 = vmatpush1.msra.mxu0 0.0
      %951 = vmatprep.subr.mxu0 0.0
      %952 = vmatpush1.msra.mxu0 0.0
      %953 = vmatprep.subr.mxu0 0.0
      %954 = vmatpush1.msra.mxu0 0.0
      %955 = vmatprep.subr.mxu0 0.0
      %956 = vmatpush1.msra.mxu0 0.0
      %957 = vmatprep.subr.mxu0 0.0
      %958 = vmatpush1.msra.mxu0 0.0
      %959 = vmatprep.subr.mxu0 0.0
      %960 = vmatpush1.msra.mxu0 0.0
      %961 = vmatprep.subr.mxu0 0.0
      %962 = vmatpush1.msra.mxu0 0.0
      %963 = vmatprep.subr.mxu0 0.0
      %964 = vmatpush1.msra.mxu0 0.0
      %965 = vmatprep.subr.mxu0 0.0
      %966 = vmatpush1.msra.mxu0 0.0
      %967 = vmatprep.subr.mxu0 0.0
      %968 = vmatpush1.msra.mxu0 0.0
      %969 = vmatprep.subr.mxu0 0.0
      %970 = vmatpush1.msra.mxu0 0.0
      %971 = vmatprep.subr.mxu0 0.0
      %972 = vmatpush1.msra.mxu0 0.0
      %973 = vmatprep.subr.mxu0 0.0
      %974 = vmatpush1.msra.mxu0 0.0
      %975 = vmatprep.subr.mxu0 0.0
      %976 = vmatpush1.msra.mxu0 0.0
      %977 = vmatprep.subr.mxu0 0.0
      %978 = vmatpush1.msra.mxu0 0.0
      %979 = vmatprep.subr.mxu0 0.0
      %980 = vmatpush1.msra.mxu0 0.0
      %981 = vmatprep.subr.mxu0 0.0
      %982 = vmatpush1.msra.mxu0 0.0
      %983 = vmatprep.subr.mxu0 0.0
      %984 = vmatpush1.msra.mxu0 0.0
      %985 = vmatprep.subr.mxu0 0.0
      %986 = vmatpush1.msra.mxu0 0.0
      %987 = vmatprep.subr.mxu0 0.0
      %988 = vmatpush1.msra.mxu0 0.0
      %989 = vmatprep.subr.mxu0 0.0
      %990 = vmatpush1.msra.mxu0 0.0
      %991 = vmatprep.subr.mxu0 0.0
      %992 = vmatpush1.msra.mxu0 0.0
      %993 = vmatprep.subr.mxu0 0.0
      %994 = vmatpush1.msra.mxu0 0.0
      %995 = vmatprep.subr.mxu0 0.0
      %996 = vmatpush1.msra.mxu0 0.0
      %997 = vmatprep.subr.mxu0 0.0
      %998 = vmatpush1.msra.mxu0 0.0
      %999 = vmatprep.subr.mxu0 0.0
      %1000 = vmatpush1.msra.mxu0 0.0
      %1001 = vmatprep.subr.mxu0 0.0
      %1002 = vmatpush1.msra.mxu0 0.0
      %1003 = vmatprep.subr.mxu0 0.0
      %1004 = vmatpush1.msra.mxu0 0.0
      %1005 = vmatprep.subr.mxu0 0.0
      %1006 = vmatpush1.msra.mxu0 0.0
      %1007 = vmatprep.subr.mxu0 0.0
      %1008 = vmatpush1.msra.mxu0 0.0
      %1009 = vmatprep.subr.mxu0 0.0
      %1010 = vmatpush1.msra.mxu0 0.0
      %1011 = vmatprep.mubr.f32.mxu0 0.0
      %1012 = vmatmul.mubr.f32.gmra.mrb[0].mxu0 %v945
      %v1013 = vpop.f32.mrb[0].mxu0
      %v1014 = vadd.f32 0.0, %v1013
      %v1015 = vpop.f32.mrb[0].mxu0
      %1016 = vdwg.mxu0
      %v1017 = vmul.f32 %v683, %v683
      %v1018 = vmul.f32 %v684, %v684
      %v1019 = vlaneseq
      %v1020 = vshrl.u32 %v1019, 7
      %v1021 = vsub.s32 0, %v1020
      %v1022 = vrot.slane %v1014, %v1021
      %v1023 = vmul.f32 %v1017, %v1022
      %v1024 = vmul.f32 %v1018, %v1022
      %v1025 = vxor.u32 %v1023, 2147483648
      %v1026 = vxor.u32 %v1024, 2147483648
      %v1027 = vmul.f32 %v1025, 1.442695
      %v1028 = vpow.pop %v1027
      %v1029 = vmul.f32 %v1026, 1.442695
      %v1030 = vpow.pop %v1029
      %v1031 = vadd.f32 %v1028, 1.0
      %v1032 = vadd.f32 %v1030, 1.0
      %v1033 = vrcp.pop %v1031
      %v1034 = vmul.f32 1.0, %v1033
      %v1035 = vrcp.pop %v1032
      %v1036 = vmul.f32 1.0, %v1035
      %1037 = vst [vmem:[%s363] sm:$0xff] %v1034
      %1038 = vst [vmem:[%s363 + $0x8] sm:$0xff] %v1036
      %p1039 = scmp.lt.s32.totalorder %s25, 1
      %s1040 = scalar_select %p1039, %s25, 1
      %s1041 = smul.addr %s1040, 2
      %s1042 = smul.addr %s1041, 8
      %s1043 = scalar_lea.vmem %s10, %s1042
      // Predicated region
      $region61: #{simplified_depthwise_ca.1} parent=59 // pred_check
        %p1044 = pneg %p258
      $region62: #{simplified_depthwise_ca.1} parent=59 // pred_check_branch
        %1046 = sbr.rel (%p1044) target = $region64
      $region63: #{simplified_depthwise_ca.1} parent=59 // pred_region
        _
      $region64: #{simplified_depthwise_ca.1} parent=59 // pred_fallthru
        _
    $region60: #{simplified_depthwise_ca.1} parent=5 // pred_fallthru
      _
    %p1047 = scmp.le.s32.totalorder 2, %s20
    // Predicated region
    $region65: #{simplified_depthwise_ca.1} parent=5 // pred_check
      %p1048 = pneg %p1047
    $region66: #{simplified_depthwise_ca.1} parent=5 // pred_check_branch
      %1050 = sbr.rel (%p1048) target = $region68
    $region67: #{simplified_depthwise_ca.1} parent=5 // pred_region
      %s1051 = ssub.s32 %s20, 2
      // Predicated region
      $region69: #{simplified_depthwise_ca.1} parent=67 // pred_check
        %p1052 = pneg %p264
      $region70: #{simplified_depthwise_ca.1} parent=67 // pred_check_branch
        %1054 = sbr.rel (%p1052) target = $region72
      $region71: #{simplified_depthwise_ca.1} parent=67 // pred_region
        %p1055 = scmp.lt.s32.totalorder %s26, 1
        %s1056 = scalar_select %p1055, %s26, 1
        %s1057 = smul.addr %s1056, 2
        %s1058 = smul.addr %s1057, 8
        %s1059 = scalar_lea.vmem %s10, %s1058
      $region72: #{simplified_depthwise_ca.1} parent=67 // pred_fallthru
        _
    $region68: #{simplified_depthwise_ca.1} parent=5 // pred_fallthru
      _
  $region6: #{simplified_depthwise_ca.1} parent=0 // loop_footer
    %s24 = sadd.s32 1, %s20
  $region7: #{simplified_depthwise_ca.1} parent=0 // loop_footer_branch
    %19 = sbr.rel target = $region3
  $region8: #{simplified_depthwise_ca.1} parent=0 // loop_exit
    _

</llo_original>
